<compile_context>
chip_gen: v6e
topology: v6e:2x2x1
jax: 0.10.0
libtpu: 0.0.40
codegen_flags: <defaults>
</compile_context>

<pallas_src>
import functools
import math

import jax
import jax.numpy as jnp
from jax import lax
from jax.experimental import pallas as pl
from jax.experimental.pallas import tpu as pltpu

EPS = 1e-5        # torch.nn.GroupNorm default eps
GROUPS = 32       # GroupNorm(32, norm_nc)


# --------------------------------------------------------------------------
# helpers
# --------------------------------------------------------------------------
def _round_up(n, m):
    return -(-n // m) * m


def _maybe_buffered_spec(block_shape, index_map, buffers=None):
    """BlockSpec with optional pipeline_mode=pl.Buffered(n); falls back to a
    plain BlockSpec if the installed jax does not accept the kwarg."""
    if buffers is None:
        return pl.BlockSpec(block_shape, index_map)
    try:
        return pl.BlockSpec(block_shape, index_map,
                            pipeline_mode=pl.Buffered(buffers))
    except Exception:
        return pl.BlockSpec(block_shape, index_map)


def _vmem_capacity_bytes():
    """Physical VMEM per TensorCore (conservative default if unqueryable)."""
    try:
        info = pltpu.get_tpu_info()
        for name in ("vmem_capacity_bytes", "vmem_bytes", "vmem_size_bytes"):
            v = getattr(info, name, None)
            if v:
                return int(v)
    except Exception:
        pass
    return 64 << 20   # v7x per-core VMEM; safe lower bound for v5e/v6e too.


def _pick_halo(T, W):
    """Smallest multiple of 128 that divides T and covers the 2-row halo."""
    need = 2 * W
    m = 128
    while m <= T:
        if T % m == 0 and m >= need:
            return m
        m += 128
    return None


def _apply_vmem_estimate(Cn, Cl, T, Hb, W, x_bytes, ctx_bytes, out_bytes,
                         conv_bytes):
    """Rough per-step VMEM working set of the apply pass (padded tiles)."""
    lane = lambda n: _round_up(max(n, 1), 128)
    sub = lambda n: _round_up(max(n, 1), 8)
    total = 0
    total += 2 * sub(Cn) * lane(T) * x_bytes            # x (double buffered)
    total += 2 * sub(Cn) * lane(T) * out_bytes          # out
    total += 2 * sub(Cl) * lane(T) * ctx_bytes          # context main blocks
    total += 2 * sub(Cl) * lane(Hb) * ctx_bytes         # context halo blocks
    total += 9 * sub(2 * Cn) * lane(Cl) * conv_bytes    # packed weights (x1)
    total += sub(2 * Cn) * lane(1) * 4                  # bias
    total += 2 * sub(Cn) * lane(1) * 4                  # mean, inv-std
    total += 3 * sub(Cn) * lane(T) * 4                  # f32 acc + normalized
    total += 4 * sub(Cl) * lane(T + 2 * W) * 4          # tap staging
    return total


# --------------------------------------------------------------------------
# kernels
# --------------------------------------------------------------------------
def _gn_stats_kernel(x_ref, sum_ref, sq_ref, sum_sc, sq_sc):
    """Pass 1: per-channel sum / sumsq over the spatial tiles of one chunk.

    x block is [1, Cn, T] (channels on sublanes, spatial on lanes); the grid
    is (B, n_chunks 'parallel', tiles_per_chunk 'arbitrary') so both v7x
    TensorCores get work even at batch 1.
    """
    t = pl.program_id(2)

    @pl.when(t == 0)
    def _():
        sum_sc[...] = jnp.zeros_like(sum_sc)
        sq_sc[...] = jnp.zeros_like(sq_sc)

    x = x_ref[0].astype(jnp.float32)                       # [Cn, T]
    sum_sc[...] += jnp.sum(x, axis=1, keepdims=True)       # [Cn, 1]
    sq_sc[...] += jnp.sum(x * x, axis=1, keepdims=True)

    @pl.when(t == pl.num_programs(2) - 1)
    def _():
        sum_ref[0, 0] = sum_sc[...]
        sq_ref[0, 0] = sq_sc[...]


def _fdn_apply_kernel(x_ref, ctx_ref, halo_ref, mean_ref, inv_ref,
                      w_ref, bias_ref, out_ref, *, W, conv_dtype, halo_offset):
    """Pass 2: in-kernel 3x3 conv of the context tile (gamma|beta packed) and
    fused normalize * gamma + beta.

    x_ref    : [1, Cn, T]        (T = Th * W flattened spatial lanes)
    ctx_ref  : [1, Cl, T]        padded-context rows [y0 .. y0+Th)
    halo_ref : [1, Cl, >=2W]     next 2 padded rows (first 2W lanes used)
    w_ref    : [9, 2Cn, Cl]      per-tap packed conv weights (gamma ; beta)
    bias_ref : [2Cn, 1]
    mean/inv : [1, Cn, 1]
    """
    cn = x_ref.shape[1]
    t_len = x_ref.shape[2]

    # Assemble the (Th+2)-row context window: main block + 2-row halo.
    ctx_main = ctx_ref[0, :, :t_len]                                  # [Cl, T]
    halo = halo_ref[0, :, halo_offset:halo_offset + 2 * W]            # [Cl, 2W]
    ctx_rows = jnp.concatenate([ctx_main, halo], axis=1)              # [Cl, T+2W]

    # Column position within each image row (T is a multiple of W).
    col = lax.broadcasted_iota(jnp.int32, (1, t_len), 1) % W
    not_left_edge = col > 0
    not_right_edge = col < (W - 1)

    # 3x3 conv: 9 accumulated [2Cn, Cl] @ [Cl, T] MXU matmuls (f32 acc).
    acc = jnp.zeros((2 * cn, t_len), jnp.float32)
    for k in range(9):
        ky, kx = divmod(k, 3)
        slab = ctx_rows[:, ky * W: ky * W + t_len]                    # [Cl, T]
        if kx == 0:        # needs ctx(., x-1): shift right, zero at x == 0
            tap = jnp.where(not_left_edge, pltpu.roll(slab, 1, axis=1), 0.0)
        elif kx == 2:      # needs ctx(., x+1): shift left, zero at x == W-1
            tap = jnp.where(not_right_edge,
                            pltpu.roll(slab, t_len - 1, axis=1), 0.0)
        else:
            tap = slab
        acc = acc + jnp.dot(w_ref[k], tap.astype(conv_dtype),
                            preferred_element_type=jnp.float32)
    gb = acc + bias_ref[...]                                          # [2Cn, T]

    x = x_ref[0].astype(jnp.float32)                                  # [Cn, T]
    normalized = (x - mean_ref[0]) * inv_ref[0]                       # bcast [Cn,1]
    out_ref[0] = (normalized * gb[:cn, :] + gb[cn:, :]).astype(out_ref.dtype)


# --------------------------------------------------------------------------
# wrapper
# --------------------------------------------------------------------------
def fdn_forward(x_nchw, ctx_nchw, wg_oihw, bg, wb_oihw, bb, *,
                conv_dtype=jnp.bfloat16, max_tile_elems=None,
                stats_chunks=2, vmem_limit_bytes=None,
                single_buffer_invariant=True):
    """x_nchw: [B, norm_nc, H, W], ctx_nchw: [B, label_nc, H, W] (PyTorch NCHW).

    Weights are in PyTorch Conv2d layout [out_ch, in_ch, 3, 3].
    conv_dtype : MXU dtype for the conv matmuls (bf16 default; GroupNorm and
                 the final affine stay in f32).
    max_tile_elems : optional cap on the flattened spatial tile; by default
                 the tile is sized from a VMEM working-set estimate.
    """
    B, Cn, H, W = x_nchw.shape
    Cl = ctx_nchw.shape[1]
    assert Cn % GROUPS == 0, "norm_nc must be divisible by 32 (GroupNorm)"
    assert ctx_nchw.shape[0] == B and ctx_nchw.shape[2:] == (H, W)
    HW = H * W
    Cg = Cn // GROUPS

    x_bytes = jnp.dtype(x_nchw.dtype).itemsize
    ctx_bytes = jnp.dtype(ctx_nchw.dtype).itemsize
    conv_bytes = jnp.dtype(conv_dtype).itemsize

    # ---- NCHW-native flat views (free reshapes, NO transposes) ------------
    x_flat = x_nchw.reshape(B, Cn, HW)                         # [B, Cn, HW]

    # ---- spatial row-tile selection (lane dim = Th*W, multiple of 128) ----
    cap = _vmem_capacity_bytes()
    budget = int(0.45 * cap)

    def _est(th):
        t = th * W
        hb = _pick_halo(t, W) or t
        return _apply_vmem_estimate(Cn, Cl, t, hb, W,
                                    x_bytes, ctx_bytes, x_bytes, conv_bytes)

    step = 128 // math.gcd(W, 128)          # min rows so that Th*W % 128 == 0
    cands = [d for d in range(step, H + 1, step) if H % d == 0 and d >= 2]
    single_tile_fallback = not cands
    if single_tile_fallback:
        Th, ntiles, T = H, 1, HW
    else:
        if max_tile_elems is not None:
            pref = [d for d in cands if d * W <= max_tile_elems] or [cands[0]]
        else:
            pref = cands
        Th = None
        for d in reversed(pref):            # largest tile that fits the budget
            if _est(d) <= budget:
                Th = d
                break
        if Th is None:
            Th = pref[0]
        T = Th * W
        ntiles = H // Th

    est = _est(Th)
    if vmem_limit_bytes is None:
        vmem_limit = int(min(0.9 * cap, max(32 << 20, 2.0 * est)))
    else:
        vmem_limit = int(vmem_limit_bytes)

    # ---- context: row-pad (zero halo rows) and flatten ---------------------
    if single_tile_fallback:
        Hb = None
        pad_bottom = 1
        halo_offset = T
    else:
        Hb = _pick_halo(T, W)               # exists: T % 128 == 0 and T >= 2W
        pad_bottom = max(1, -(-Hb // W) - 1)
        halo_offset = 0
    R = H + 1 + pad_bottom
    Lpad = R * W
    ctx_flat = jnp.pad(ctx_nchw,
                       ((0, 0), (0, 0), (1, pad_bottom), (0, 0))
                       ).reshape(B, Cl, Lpad)

    if single_tile_fallback:
        ctx_main_spec = pl.BlockSpec((1, Cl, Lpad), lambda b, t: (b, 0, 0))
        ctx_halo_spec = pl.BlockSpec((1, Cl, Lpad), lambda b, t: (b, 0, 0))
    else:
        blocks_per_tile = T // Hb
        ctx_main_spec = pl.BlockSpec((1, Cl, T), lambda b, t: (b, 0, t))
        ctx_halo_spec = pl.BlockSpec(
            (1, Cl, Hb), lambda b, t: (b, 0, (t + 1) * blocks_per_tile))

    # ---- packed conv parameters: per-tap [2Cn, Cl] (gamma ; beta) ----------
    w_pack = jnp.concatenate([wg_oihw, wb_oihw], axis=0)       # [2Cn, Cl, 3, 3]
    w_pack = jnp.transpose(w_pack, (2, 3, 0, 1)).reshape(9, 2 * Cn, Cl)
    w_pack = w_pack.astype(conv_dtype)
    bias_pack = jnp.concatenate([bg, bb], axis=0).astype(jnp.float32)[:, None]

    inv_buf = 1 if single_buffer_invariant else None

    # ---- pass 1: GroupNorm statistics (chunked partial sum / sumsq) --------
    if stats_chunks > 1 and ntiles % stats_chunks == 0:
        n_chunks = stats_chunks
    else:
        n_chunks = 1
    tiles_per_chunk = ntiles // n_chunks

    part_shape = jax.ShapeDtypeStruct((B, n_chunks, Cn, 1), jnp.float32)
    sum_p, sq_p = pl.pallas_call(
        _gn_stats_kernel,
        out_shape=(part_shape, part_shape),
        grid_spec=pltpu.PrefetchScalarGridSpec(
            num_scalar_prefetch=0,
            grid=(B, n_chunks, tiles_per_chunk),
            in_specs=[
                pl.BlockSpec((1, Cn, T),
                             lambda b, c, t: (b, 0, c * tiles_per_chunk + t)),
            ],
            out_specs=(
                pl.BlockSpec((1, 1, Cn, 1), lambda b, c, t: (b, c, 0, 0)),
                pl.BlockSpec((1, 1, Cn, 1), lambda b, c, t: (b, c, 0, 0)),
            ),
            scratch_shapes=[pltpu.VMEM((Cn, 1), jnp.float32),
                            pltpu.VMEM((Cn, 1), jnp.float32)]),
        compiler_params=pltpu.CompilerParams(
            dimension_semantics=("parallel", "parallel", "arbitrary"),
            vmem_limit_bytes=vmem_limit),
    )(x_flat)

    # ---- tiny XLA epilogue: chunk reduce + group mean / inv-std ------------
    # Single-pass E[x^2]-E[x]^2 in f32 (see review note); fine for roughly
    # zero-mean activations, switch to a shifted variant otherwise.
    csum = sum_p.sum(axis=1)[..., 0]                        # [B, Cn]
    csq = sq_p.sum(axis=1)[..., 0]
    n = float(HW * Cg)
    mean_g = csum.reshape(B, GROUPS, Cg).sum(-1) / n        # [B, G]
    var_g = jnp.maximum(csq.reshape(B, GROUPS, Cg).sum(-1) / n
                        - mean_g * mean_g, 0.0)
    inv_g = lax.rsqrt(var_g + EPS)
    mean_c = jnp.repeat(mean_g, Cg, axis=1).reshape(B, Cn, 1)
    inv_c = jnp.repeat(inv_g, Cg, axis=1).reshape(B, Cn, 1)

    # ---- pass 2: fused in-kernel conv + normalize * gamma + beta -----------
    kern = functools.partial(_fdn_apply_kernel, W=W, conv_dtype=conv_dtype,
                             halo_offset=halo_offset)
    out_flat = pl.pallas_call(
        kern,
        out_shape=jax.ShapeDtypeStruct((B, Cn, HW), x_nchw.dtype),
        grid_spec=pltpu.PrefetchScalarGridSpec(
            num_scalar_prefetch=0,
            grid=(B, ntiles),
            in_specs=[
                pl.BlockSpec((1, Cn, T), lambda b, t: (b, 0, t)),
                ctx_main_spec,
                ctx_halo_spec,
                _maybe_buffered_spec((1, Cn, 1), lambda b, t: (b, 0, 0),
                                     inv_buf),
                _maybe_buffered_spec((1, Cn, 1), lambda b, t: (b, 0, 0),
                                     inv_buf),
                _maybe_buffered_spec((9, 2 * Cn, Cl), lambda b, t: (0, 0, 0),
                                     inv_buf),
                _maybe_buffered_spec((2 * Cn, 1), lambda b, t: (0, 0),
                                     inv_buf),
            ],
            out_specs=pl.BlockSpec((1, Cn, T), lambda b, t: (b, 0, t))),
        compiler_params=pltpu.CompilerParams(
            dimension_semantics=("parallel", "parallel"),
            vmem_limit_bytes=vmem_limit),
    )(x_flat, ctx_flat, ctx_flat, mean_c, inv_c, w_pack, bias_pack)

    return out_flat.reshape(B, Cn, H, W)


# --------------------------------------------------------------------------
# pure-JAX reference (matches the PyTorch module)
# --------------------------------------------------------------------------
def fdn_reference(x, ctx, wg, bg, wb, bb):
    B, Cn, H, W = x.shape
    Cg = Cn // GROUPS
    xg = x.reshape(B, GROUPS, Cg, H, W)
    mean = xg.mean(axis=(2, 3, 4), keepdims=True)
    var = ((xg - mean) ** 2).mean(axis=(2, 3, 4), keepdims=True)
    normed = ((xg - mean) / jnp.sqrt(var + EPS)).reshape(B, Cn, H, W)

    def conv(w, b):
        y = lax.conv_general_dilated(
            ctx, w, window_strides=(1, 1), padding="SAME",
            dimension_numbers=("NCHW", "OIHW", "NCHW"),
            precision=lax.Precision.HIGHEST)
        return y + b[None, :, None, None]

    return normed * conv(wg, bg) + conv(wb, bb)


# --------------------------------------------------------------------------
# self-test
# --------------------------------------------------------------------------
if __name__ == "__main__":
    def run_case(B, Cn, Cl, H, W, key, conv_dtype, max_tile_elems, atol, tag):
        ks = jax.random.split(key, 6)
        x = jax.random.normal(ks[0], (B, Cn, H, W), jnp.float32)
        ctx = jax.random.normal(ks[1], (B, Cl, H, W), jnp.float32)
        wg = 0.1 * jax.random.normal(ks[2], (Cn, Cl, 3, 3), jnp.float32)
        bg = 0.1 * jax.random.normal(ks[3], (Cn,), jnp.float32)
        wb = 0.1 * jax.random.normal(ks[4], (Cn, Cl, 3, 3), jnp.float32)
        bb = 0.1 * jax.random.normal(ks[5], (Cn,), jnp.float32)

        out = fdn_forward(x, ctx, wg, bg, wb, bb, conv_dtype=conv_dtype,
                          max_tile_elems=max_tile_elems)
        jax.block_until_ready(out)
        assert out.shape == x.shape
        ref = fdn_reference(x, ctx, wg, bg, wb, bb)
        err = float(jnp.max(jnp.abs(out - ref)))
        assert err < atol, f"{tag}: max abs err {err} (atol {atol})"

    key = jax.random.PRNGKey(0)
    k1, k2, k3 = jax.random.split(key, 3)

    # f32 conv path, single spatial tile (tight check vs f32 reference).
    run_case(2, 128, 4, 16, 16, k1, jnp.float32, None, 3e-4, "f32/1tile")
    # bf16 MXU conv path, 2 spatial tiles + 2 stats chunks.
    run_case(2, 128, 4, 16, 16, k2, jnp.bfloat16, 128, 1.5e-1, "bf16/2tile")
    # 3 tiles in one stats chunk (cross-tile accumulation), Cn=64, Cl=3.
    run_case(1, 64, 3, 24, 16, k3, jnp.float32, 128, 3e-4, "f32/3tile")

    print("KERNEL_OK")
</pallas_src>

<mosaic_0001>
module attributes {stable_mosaic.version = 11 : i64} {
  func.func @_gn_stats_kernel(%arg0: i32, %arg1: i32, %arg2: i32, %arg3: memref<1x128x256xf32, #tpu.memory_space<vmem>>, %arg4: memref<1x1x128x1xf32, #tpu.memory_space<vmem>>, %arg5: memref<1x1x128x1xf32, #tpu.memory_space<vmem>>, %arg6: memref<128x1xf32, #tpu.memory_space<vmem>>, %arg7: memref<128x1xf32, #tpu.memory_space<vmem>>) attributes {dimension_semantics = [#tpu.dimension_semantics<parallel>, #tpu.dimension_semantics<parallel>, #tpu.dimension_semantics<arbitrary>], iteration_bounds = array<i64: 2, 1, 1>, scalar_prefetch = 0 : i64, scratch_operands = 2 : i64, tpu.core_type = #tpu.core_type<tc>, window_params = [{transform_indices = @transform_0, window_bounds = array<i64: 1, 128, 256>}, {transform_indices = @transform_1, window_bounds = array<i64: 1, 1, 128, 1>}, {transform_indices = @transform_2, window_bounds = array<i64: 1, 1, 128, 1>}]} {
    %c0_i32 = arith.constant 0 : i32
    %0 = arith.cmpi eq, %arg2, %c0_i32 : i32
    %1 = arith.extui %0 : i1 to i32
    %c0_i32_0 = arith.constant 0 : i32
    %2 = arith.cmpi ne, %1, %c0_i32_0 : i32
    scf.if %2 {
      %cst_14 = arith.constant 0.000000e+00 : f32
      %19 = vector.broadcast %cst_14 : f32 to vector<128x1xf32>
      %c0_15 = arith.constant 0 : index
      %c0_16 = arith.constant 0 : index
      %20 = vector.load %arg6[%c0_15, %c0_16] : memref<128x1xf32, #tpu.memory_space<vmem>>, vector<128x1xf32>
      tpu.vector_store %arg6[%c0_15, %c0_16], %19 {strides = array<i32>} : memref<128x1xf32, #tpu.memory_space<vmem>>, vector<128x1xf32>,
      %cst_17 = arith.constant 0.000000e+00 : f32
      %21 = vector.broadcast %cst_17 : f32 to vector<128x1xf32>
      %c0_18 = arith.constant 0 : index
      %c0_19 = arith.constant 0 : index
      %22 = vector.load %arg7[%c0_18, %c0_19] : memref<128x1xf32, #tpu.memory_space<vmem>>, vector<128x1xf32>
      tpu.vector_store %arg7[%c0_18, %c0_19], %21 {strides = array<i32>} : memref<128x1xf32, #tpu.memory_space<vmem>>, vector<128x1xf32>,
    } else {
    }
    %c0 = arith.constant 0 : index
    %c0_1 = arith.constant 0 : index
    %c0_2 = arith.constant 0 : index
    %3 = vector.load %arg3[%c0, %c0_1, %c0_2] : memref<1x128x256xf32, #tpu.memory_space<vmem>>, vector<1x128x256xf32>
    %4 = vector.shape_cast %3 : vector<1x128x256xf32> to vector<128x256xf32>
    %c0_3 = arith.constant 0 : index
    %c0_4 = arith.constant 0 : index
    %5 = vector.load %arg6[%c0_3, %c0_4] : memref<128x1xf32, #tpu.memory_space<vmem>>, vector<128x1xf32>
    %cst = arith.constant dense<0.000000e+00> : vector<128xf32>
    %6 = vector.multi_reduction <add>, %4, %cst [1] : vector<128x256xf32> to vector<128xf32>
    %7 = vector.shape_cast %6 : vector<128xf32> to vector<128x1xf32>
    %8 = arith.addf %5, %7 : vector<128x1xf32>
    %c0_5 = arith.constant 0 : index
    %c0_6 = arith.constant 0 : index
    %9 = vector.load %arg6[%c0_5, %c0_6] : memref<128x1xf32, #tpu.memory_space<vmem>>, vector<128x1xf32>
    tpu.vector_store %arg6[%c0_5, %c0_6], %8 {strides = array<i32>} : memref<128x1xf32, #tpu.memory_space<vmem>>, vector<128x1xf32>,
    %c0_7 = arith.constant 0 : index
    %c0_8 = arith.constant 0 : index
    %10 = vector.load %arg7[%c0_7, %c0_8] : memref<128x1xf32, #tpu.memory_space<vmem>>, vector<128x1xf32>
    %11 = arith.mulf %4, %4 : vector<128x256xf32>
    %cst_9 = arith.constant dense<0.000000e+00> : vector<128xf32>
    %12 = vector.multi_reduction <add>, %11, %cst_9 [1] : vector<128x256xf32> to vector<128xf32>
    %13 = vector.shape_cast %12 : vector<128xf32> to vector<128x1xf32>
    %14 = arith.addf %10, %13 : vector<128x1xf32>
    %c0_10 = arith.constant 0 : index
    %c0_11 = arith.constant 0 : index
    %15 = vector.load %arg7[%c0_10, %c0_11] : memref<128x1xf32, #tpu.memory_space<vmem>>, vector<128x1xf32>
    tpu.vector_store %arg7[%c0_10, %c0_11], %14 {strides = array<i32>} : memref<128x1xf32, #tpu.memory_space<vmem>>, vector<128x1xf32>,
    %c0_i32_12 = arith.constant 0 : i32
    %16 = arith.cmpi eq, %arg2, %c0_i32_12 : i32
    %17 = arith.extui %16 : i1 to i32
    %c0_i32_13 = arith.constant 0 : i32
    %18 = arith.cmpi ne, %17, %c0_i32_13 : i32
    scf.if %18 {
      %c0_14 = arith.constant 0 : index
      %c0_15 = arith.constant 0 : index
      %19 = vector.load %arg6[%c0_14, %c0_15] : memref<128x1xf32, #tpu.memory_space<vmem>>, vector<128x1xf32>
      %c0_16 = arith.constant 0 : index
      %c0_17 = arith.constant 0 : index
      %c0_18 = arith.constant 0 : index
      %c0_19 = arith.constant 0 : index
      %20 = vector.load %arg4[%c0_16, %c0_17, %c0_18, %c0_19] : memref<1x1x128x1xf32, #tpu.memory_space<vmem>>, vector<1x1x128x1xf32>
      %21 = vector.shape_cast %20 : vector<1x1x128x1xf32> to vector<128x1xf32>
      %22 = vector.shape_cast %19 : vector<128x1xf32> to vector<1x1x128x1xf32>
      tpu.vector_store %arg4[%c0_16, %c0_17, %c0_18, %c0_19], %22 {strides = array<i32>} : memref<1x1x128x1xf32, #tpu.memory_space<vmem>>, vector<1x1x128x1xf32>,
      %c0_20 = arith.constant 0 : index
      %c0_21 = arith.constant 0 : index
      %23 = vector.load %arg7[%c0_20, %c0_21] : memref<128x1xf32, #tpu.memory_space<vmem>>, vector<128x1xf32>
      %c0_22 = arith.constant 0 : index
      %c0_23 = arith.constant 0 : index
      %c0_24 = arith.constant 0 : index
      %c0_25 = arith.constant 0 : index
      %24 = vector.load %arg5[%c0_22, %c0_23, %c0_24, %c0_25] : memref<1x1x128x1xf32, #tpu.memory_space<vmem>>, vector<1x1x128x1xf32>
      %25 = vector.shape_cast %24 : vector<1x1x128x1xf32> to vector<128x1xf32>
      %26 = vector.shape_cast %23 : vector<128x1xf32> to vector<1x1x128x1xf32>
      tpu.vector_store %arg5[%c0_22, %c0_23, %c0_24, %c0_25], %26 {strides = array<i32>} : memref<1x1x128x1xf32, #tpu.memory_space<vmem>>, vector<1x1x128x1xf32>,
    } else {
    }
    return
  }
  func.func @transform_0(%arg0: i32, %arg1: i32, %arg2: i32) -> (i32, i32, i32) {
    %c1_i32 = arith.constant 1 : i32
    %0 = arith.muli %arg1, %c1_i32 : i32
    %1 = arith.addi %0, %arg2 : i32
    %c0_i32 = arith.constant 0 : i32
    %c0_i32_0 = arith.constant 0 : i32
    return %arg0, %c0_i32, %1 : i32, i32, i32
  }
  func.func @transform_1(%arg0: i32, %arg1: i32, %arg2: i32) -> (i32, i32, i32, i32) {
    %c0_i32 = arith.constant 0 : i32
    %c0_i32_0 = arith.constant 0 : i32
    %c0_i32_1 = arith.constant 0 : i32
    return %arg0, %arg1, %c0_i32, %c0_i32_0 : i32, i32, i32, i32
  }
  func.func @transform_2(%arg0: i32, %arg1: i32, %arg2: i32) -> (i32, i32, i32, i32) {
    %c0_i32 = arith.constant 0 : i32
    %c0_i32_0 = arith.constant 0 : i32
    %c0_i32_1 = arith.constant 0 : i32
    return %arg0, %arg1, %c0_i32, %c0_i32_0 : i32, i32, i32, i32
  }
}

</mosaic_0001>

<llo_original>
// kernel: tpu_custom_call.1
$region0: #{tpu_custom_call.1}
  #allocation0 [shape = 'u32[]', space=smem, size = 0x4, offset = 0x4, fixed_abs, tag = 'smem constant byte address 0x4 - core index']
  #allocation1 [shape = 'u32[144,128]{1,0:T(1,128)}', space=vmem, size = 0x12000, scoped, tag = 'internal scratch']
  #allocation2 [shape = 'f32[128,1]{1,0:T(8,128)}', space=vmem, size = 0x10000, scoped, tag = 'scratch operand']
  #allocation3 [shape = 'f32[128,1]{1,0:T(8,128)}', space=vmem, size = 0x10000, scoped, tag = 'scratch operand']
  %s0 = inlined_call_operand.hbm [shape: f32[2,128,256], index: 0, kind: input, shape index: {}]
  %s1 = inlined_call_operand.vmem [shape: f32[2,1,128,1], index: 1, kind: output, shape index: {0}]
  %s2 = inlined_call_operand.vmem [shape: f32[2,1,128,1], index: 2, kind: output, shape index: {1}]
  %3 = xla_tuple %s1, %s2
  %s4 = sld [smem:[#allocation0]]
  $region57: #{tpu_custom_call.1} parent=0
    _
  %s6 = ssub.s32 1, %s4
  %s7 = scalar_select 0, %s6, %s4
  $region1: #{tpu_custom_call.1} parent=0
    #allocation4 [shape = 'u8[262144]{0}', space=vmem, size = 0x40000, scoped, tag = 'input window, operand 0']
    #allocation5 [shape = 's32[2]{0}', space=sflag, size = 0x8, scoped, tag = 'scoped memory for tpu_custom_call.1']
    %8 = vsyncpa [#allocation5], 0
    %s9 = scalar_lea.sflag [#allocation5], 1
    %10 = vsyncpa %s9, 0
    loop: start=0, step=1, limit=4
    $region2: #{tpu_custom_call.1} parent=1 // loop_pre_header
      _
    $region3: #{tpu_custom_call.1} parent=1 // loop_header
      %s12 = sphi 0, %s16
      %p13 = scmp.ge.s32.totalorder %s12, 4
      %s19 = sphi 0, %s38
      %s20 = sphi 0, %s34
      %s21 = sphi 0, %s30
      %s22 = sphi 0, %s19
      %s23 = sphi 0, %s20
      %s24 = sphi 0, %s21
      %s25 = sphi 0, %s22
      %s26 = sphi 0, %s23
      %s27 = sphi 0, %s24
      %s45 = sphi 0, %s47
      %s48 = sphi 0, %s45
      %s49 = sphi 0, %s48
      %s65 = sphi 0, %s49
      %s73 = sphi 0, %s75
      %s76 = sphi 0, %s73
      %s77 = sphi 0, %s76
      %s93 = sphi 0, %s77
      %s101 = sphi 0, %s103
      %s104 = sphi 0, %s101
      %s105 = sphi 0, %s104
      %s121 = sphi 0, %s105
    $region4: #{tpu_custom_call.1} parent=1 // loop_header_branch
      %15 = sbr.rel (%p13) target = $region8
    $region5: #{tpu_custom_call.1} parent=1 // loop_body
      %s17 = ssub.s32 %s12, 1
      %s18 = ssub.s32 %s12, 2
      %s28 = sadd.s32 1, %s21
      %p29 = scmp.ge.s32.totalorder %s28, 1
      %s30 = scalar_select %p29, 0, %s28
      %s31 = sadd.s32 1, %s20
      %s32 = scalar_select %p29, %s31, %s20
      %p33 = scmp.ge.s32.totalorder %s32, 1
      %s34 = scalar_select %p33, 0, %s32
      %s35 = sadd.s32 1, %s19
      %s36 = scalar_select %p33, %s35, %s19
      %p37 = scmp.ge.s32.totalorder %s36, 2
      %s38 = scalar_select %p37, 0, %s36
      %s39 = sadd.s32 %s20, %s21
      %s40 = sadd.s32 %s34, %s30
      %s41 = ssub.s32 %s19, %s38
      %s42 = ssub.s32 %s39, %s40
      %s43 = sor.u32 %s41, %s42
      %p44 = scmp.eq.s32.totalorder %s43, 0
      %s46 = sadd.s32 %s45, 1
      %s47 = scalar_select %p44, %s45, %s46
      %p50 = pneg %p44
      %p51 = scmp.eq.s32.totalorder %s12, 1
      %p52 = por %p50, %p51
      %p53 = scmp.ne.s32.totalorder %s45, %s48
      %p54 = scmp.eq.s32.totalorder %s12, 0
      %p55 = por %p53, %p54
      %p56 = scmp.ne.s32.totalorder %s45, %s48
      %p57 = scmp.eq.s32.totalorder %s17, 1
      %p58 = por %p56, %p57
      %p59 = scmp.ne.s32.totalorder %s48, %s49
      %p60 = scmp.eq.s32.totalorder %s17, 0
      %p61 = por %p59, %p60
      %p62 = scmp.ne.s32.totalorder %s48, %s49
      %p63 = scmp.eq.s32.totalorder %s18, 1
      %p64 = por %p62, %p63
      %p66 = scmp.ne.s32.totalorder %s49, %s65
      %p67 = scmp.eq.s32.totalorder %s18, 0
      %p68 = por %p66, %p67
      %s69 = ssub.s32 %s19, %s38
      %s70 = ssub.s32 %s20, %s34
      %s71 = sor.u32 %s69, %s70
      %p72 = scmp.eq.s32.totalorder %s71, 0
      %s74 = sadd.s32 %s73, 1
      %s75 = scalar_select %p72, %s73, %s74
      %p78 = pneg %p72
      %p79 = scmp.eq.s32.totalorder %s12, 1
      %p80 = por %p78, %p79
      %p81 = scmp.ne.s32.totalorder %s73, %s76
      %p82 = scmp.eq.s32.totalorder %s12, 0
      %p83 = por %p81, %p82
      %p84 = scmp.ne.s32.totalorder %s73, %s76
      %p85 = scmp.eq.s32.totalorder %s17, 1
      %p86 = por %p84, %p85
      %p87 = scmp.ne.s32.totalorder %s76, %s77
      %p88 = scmp.eq.s32.totalorder %s17, 0
      %p89 = por %p87, %p88
      %p90 = scmp.ne.s32.totalorder %s76, %s77
      %p91 = scmp.eq.s32.totalorder %s18, 1
      %p92 = por %p90, %p91
      %p94 = scmp.ne.s32.totalorder %s77, %s93
      %p95 = scmp.eq.s32.totalorder %s18, 0
      %p96 = por %p94, %p95
      %s97 = ssub.s32 %s19, %s38
      %s98 = ssub.s32 %s20, %s34
      %s99 = sor.u32 %s97, %s98
      %p100 = scmp.eq.s32.totalorder %s99, 0
      %s102 = sadd.s32 %s101, 1
      %s103 = scalar_select %p100, %s101, %s102
      %p106 = pneg %p100
      %p107 = scmp.eq.s32.totalorder %s12, 1
      %p108 = por %p106, %p107
      %p109 = scmp.ne.s32.totalorder %s101, %s104
      %p110 = scmp.eq.s32.totalorder %s12, 0
      %p111 = por %p109, %p110
      %p112 = scmp.ne.s32.totalorder %s101, %s104
      %p113 = scmp.eq.s32.totalorder %s17, 1
      %p114 = por %p112, %p113
      %p115 = scmp.ne.s32.totalorder %s104, %s105
      %p116 = scmp.eq.s32.totalorder %s17, 0
      %p117 = por %p115, %p116
      %p118 = scmp.ne.s32.totalorder %s104, %s105
      %p119 = scmp.eq.s32.totalorder %s18, 1
      %p120 = por %p118, %p119
      %p122 = scmp.ne.s32.totalorder %s105, %s121
      %p123 = scmp.eq.s32.totalorder %s18, 0
      %p124 = por %p122, %p123
      %p125 = scmp.le.s32.totalorder 1, %s12
      %p126 = scmp.lt.s32.totalorder %s12, 3
      %p127 = pnand %p125, %p126
      %p128 = pneg %p127
      // Predicated region
      $region9: #{tpu_custom_call.1} parent=5 // pred_check
        _
      $region10: #{tpu_custom_call.1} parent=5 // pred_check_branch
        %130 = sbr.rel (%p127) target = $region12
      $region11: #{tpu_custom_call.1} parent=5 // pred_region
        %s131 = ssub.s32 %s12, 1
      $region12: #{tpu_custom_call.1} parent=5 // pred_fallthru
        _
      %p132 = scmp.lt.s32.totalorder %s12, 2
      // Predicated region
      $region13: #{tpu_custom_call.1} parent=5 // pred_check
        %p133 = pneg %p132
      $region14: #{tpu_custom_call.1} parent=5 // pred_check_branch
        %135 = sbr.rel (%p133) target = $region16
      $region15: #{tpu_custom_call.1} parent=5 // pred_region
        // Predicated region
        $region17: #{tpu_custom_call.1} parent=15 // pred_check
          %p136 = pneg %p55
        $region18: #{tpu_custom_call.1} parent=15 // pred_check_branch
          %138 = sbr.rel (%p136) target = $region20
        $region19: #{tpu_custom_call.1} parent=15 // pred_region
          %s139 = sand.u32 %s45, 1
          %s140 = scalar_lea.sflag [#allocation5], %s139
          %s141 = sand.u32 %s45, 1
          %s142 = smul.addr %s141, 256
          %s143 = scalar_lea.vmem [#allocation4], %s142
          %s144 = sadd.s32 %s20, %s21
          %s145 = smul.u32 2, %s144
          %s147 = ssub.s32 4096, 4096
          %148 = vsyncadd %s140, %s147
          %s149 = smul.addr %s19, 32
          %s150 = sadd.s32 %s145, %s149
          %s151 = smul.addr %s150, 128
          %s152 = scalar_lea.hbm %s0, %s151
          %s153 = sshll.u32 %s143, 4
          %s154 = int_to_ptr.vmem [resolvable:$true] %s153
          %159 = dma.hbm_to_vmem [thread:$0]  %s152, 4096, %s154, %s140, 256, 256, 16
        $region20: #{tpu_custom_call.1} parent=15 // pred_fallthru
          _
      $region16: #{tpu_custom_call.1} parent=5 // pred_fallthru
        _
      %p160 = scmp.le.s32.totalorder 1, %s12
      %p161 = scmp.lt.s32.totalorder %s12, 3
      %p162 = pnand %p160, %p161
      %p163 = pneg %p162
      // Predicated region
      $region21: #{tpu_custom_call.1} parent=5 // pred_check
        _
      $region22: #{tpu_custom_call.1} parent=5 // pred_check_branch
        %165 = sbr.rel (%p162) target = $region24
      $region23: #{tpu_custom_call.1} parent=5 // pred_region
        %s166 = ssub.s32 %s12, 1
        %s167 = sand.u32 %s48, 1
        %s168 = scalar_lea.sflag [#allocation5], %s167
        %s169 = sand.u32 %s48, 1
        %s170 = smul.addr %s169, 256
        %s171 = scalar_lea.vmem [#allocation4], %s170
        // Predicated region
        $region25: #{tpu_custom_call.1} parent=23 // pred_check
          %p172 = pneg %p61
        $region26: #{tpu_custom_call.1} parent=23 // pred_check_branch
          %174 = sbr.rel (%p172) target = $region28
        $region27: #{tpu_custom_call.1} parent=23 // pred_region
          %175 = dma.done %s168, 4096
        $region28: #{tpu_custom_call.1} parent=23 // pred_fallthru
          _
        %s176 = sand.u32 %s48, 1
        %s177 = scalar_lea.sflag [#allocation5], %s176
        %s178 = sand.u32 %s48, 1
        %s179 = smul.addr %s178, 256
        %s180 = scalar_lea.vmem [#allocation4], %s179
        %p181 = pneg %p61
        %p182 = pneg %p58
        %p183 = pneg %p89
        %p184 = pneg %p86
        %p185 = scmp.lt.s32.totalorder %s22, 1
        %s186 = scalar_select %p185, %s22, 1
        %p187 = scmp.lt.s32.totalorder %s23, 0
        %s188 = scalar_select %p187, %s23, 0
        %s189 = smul.addr %s188, 16
        %s190 = smul.addr %s186, 16
        %s191 = sadd.s32 %s189, %s190
        %s192 = smul.addr %s191, 8
        %s193 = scalar_lea.vmem %s1, %s192
        %p194 = pneg %p117
        %p195 = pneg %p114
        %p196 = scmp.lt.s32.totalorder %s22, 1
        %s197 = scalar_select %p196, %s22, 1
        %p198 = scmp.lt.s32.totalorder %s23, 0
        %s199 = scalar_select %p198, %s23, 0
        %s200 = smul.addr %s199, 16
        %s201 = smul.addr %s197, 16
        %s202 = sadd.s32 %s200, %s201
        %s203 = smul.addr %s202, 8
        %s204 = scalar_lea.vmem %s2, %s203
        %s205 = sadd.s32 %s23, %s24
        %s206 = smul.u32 2, %s205
        %p207 = scmp.lt.s32.totalorder %s22, 1
        %s208 = scalar_select %p207, %s22, 1
        %p209 = scmp.lt.s32.totalorder %s23, 0
        %s210 = scalar_select %p209, %s23, 0
        %s211 = smul.addr %s210, 16
        %s212 = smul.addr %s208, 16
        %s213 = sadd.s32 %s211, %s212
        %s214 = smul.addr %s213, 8
        %s215 = scalar_lea.vmem %s1, %s214
        %p216 = scmp.lt.s32.totalorder %s22, 1
        %s217 = scalar_select %p216, %s22, 1
        %p218 = scmp.lt.s32.totalorder %s23, 0
        %s219 = scalar_select %p218, %s23, 0
        %s220 = smul.addr %s219, 16
        %s221 = smul.addr %s217, 16
        %s222 = sadd.s32 %s220, %s221
        %s223 = smul.addr %s222, 8
        %s224 = scalar_lea.vmem %s2, %s223
        %p225 = scmp.eq.s32.totalorder %s24, 0
        // Predicated region
        $region29: #{tpu_custom_call.1} parent=23 // pred_check
          %p226 = pneg %p225
        $region30: #{tpu_custom_call.1} parent=23 // pred_check_branch
          %228 = sbr.rel (%p226) target = $region32
        $region31: #{tpu_custom_call.1} parent=23 // pred_region
          %vm229 = vcmask 7168
          %230 = vst.msk [vmem:[#allocation2] sm:$0xff] %vm229, 0.0
          %231 = vst.msk [vmem:[#allocation2 + $0x8] sm:$0xff] %vm229, 0.0
          %232 = vst.msk [vmem:[#allocation2 + $0x10] sm:$0xff] %vm229, 0.0
          %233 = vst.msk [vmem:[#allocation2 + $0x18] sm:$0xff] %vm229, 0.0
          %234 = vst.msk [vmem:[#allocation2 + $0x20] sm:$0xff] %vm229, 0.0
          %235 = vst.msk [vmem:[#allocation2 + $0x28] sm:$0xff] %vm229, 0.0
          %236 = vst.msk [vmem:[#allocation2 + $0x30] sm:$0xff] %vm229, 0.0
          %237 = vst.msk [vmem:[#allocation2 + $0x38] sm:$0xff] %vm229, 0.0
          %238 = vst.msk [vmem:[#allocation2 + $0x40] sm:$0xff] %vm229, 0.0
          %239 = vst.msk [vmem:[#allocation2 + $0x48] sm:$0xff] %vm229, 0.0
          %240 = vst.msk [vmem:[#allocation2 + $0x50] sm:$0xff] %vm229, 0.0
          %241 = vst.msk [vmem:[#allocation2 + $0x58] sm:$0xff] %vm229, 0.0
          %242 = vst.msk [vmem:[#allocation2 + $0x60] sm:$0xff] %vm229, 0.0
          %243 = vst.msk [vmem:[#allocation2 + $0x68] sm:$0xff] %vm229, 0.0
          %244 = vst.msk [vmem:[#allocation2 + $0x70] sm:$0xff] %vm229, 0.0
          %245 = vst.msk [vmem:[#allocation2 + $0x78] sm:$0xff] %vm229, 0.0
          %246 = vst.msk [vmem:[#allocation3] sm:$0xff] %vm229, 0.0
          %247 = vst.msk [vmem:[#allocation3 + $0x8] sm:$0xff] %vm229, 0.0
          %248 = vst.msk [vmem:[#allocation3 + $0x10] sm:$0xff] %vm229, 0.0
          %249 = vst.msk [vmem:[#allocation3 + $0x18] sm:$0xff] %vm229, 0.0
          %250 = vst.msk [vmem:[#allocation3 + $0x20] sm:$0xff] %vm229, 0.0
          %251 = vst.msk [vmem:[#allocation3 + $0x28] sm:$0xff] %vm229, 0.0
          %252 = vst.msk [vmem:[#allocation3 + $0x30] sm:$0xff] %vm229, 0.0
          %253 = vst.msk [vmem:[#allocation3 + $0x38] sm:$0xff] %vm229, 0.0
          %254 = vst.msk [vmem:[#allocation3 + $0x40] sm:$0xff] %vm229, 0.0
          %255 = vst.msk [vmem:[#allocation3 + $0x48] sm:$0xff] %vm229, 0.0
          %256 = vst.msk [vmem:[#allocation3 + $0x50] sm:$0xff] %vm229, 0.0
          %257 = vst.msk [vmem:[#allocation3 + $0x58] sm:$0xff] %vm229, 0.0
          %258 = vst.msk [vmem:[#allocation3 + $0x60] sm:$0xff] %vm229, 0.0
          %259 = vst.msk [vmem:[#allocation3 + $0x68] sm:$0xff] %vm229, 0.0
          %260 = vst.msk [vmem:[#allocation3 + $0x70] sm:$0xff] %vm229, 0.0
          %261 = vst.msk [vmem:[#allocation3 + $0x78] sm:$0xff] %vm229, 0.0
        $region32: #{tpu_custom_call.1} parent=23 // pred_fallthru
          _
        %v262 = vld [vmem:[%s171] sm:$0xff]
        %v263 = vld [vmem:[%s171 + $0x8] sm:$0xff]
        %v264 = vld [vmem:[%s171 + $0x10] sm:$0xff]
        %v265 = vld [vmem:[%s171 + $0x18] sm:$0xff]
        %v266 = vld [vmem:[%s171 + $0x20] sm:$0xff]
        %v267 = vld [vmem:[%s171 + $0x28] sm:$0xff]
        %v268 = vld [vmem:[%s171 + $0x30] sm:$0xff]
        %v269 = vld [vmem:[%s171 + $0x38] sm:$0xff]
        %v270 = vld [vmem:[%s171 + $0x40] sm:$0xff]
        %v271 = vld [vmem:[%s171 + $0x48] sm:$0xff]
        %v272 = vld [vmem:[%s171 + $0x50] sm:$0xff]
        %v273 = vld [vmem:[%s171 + $0x58] sm:$0xff]
        %v274 = vld [vmem:[%s171 + $0x60] sm:$0xff]
        %v275 = vld [vmem:[%s171 + $0x68] sm:$0xff]
        %v276 = vld [vmem:[%s171 + $0x70] sm:$0xff]
        %v277 = vld [vmem:[%s171 + $0x78] sm:$0xff]
        %v278 = vld [vmem:[%s171 + $0x80] sm:$0xff]
        %v279 = vld [vmem:[%s171 + $0x88] sm:$0xff]
        %v280 = vld [vmem:[%s171 + $0x90] sm:$0xff]
        %v281 = vld [vmem:[%s171 + $0x98] sm:$0xff]
        %v282 = vld [vmem:[%s171 + $0xa0] sm:$0xff]
        %v283 = vld [vmem:[%s171 + $0xa8] sm:$0xff]
        %v284 = vld [vmem:[%s171 + $0xb0] sm:$0xff]
        %v285 = vld [vmem:[%s171 + $0xb8] sm:$0xff]
        %v286 = vld [vmem:[%s171 + $0xc0] sm:$0xff]
        %v287 = vld [vmem:[%s171 + $0xc8] sm:$0xff]
        %v288 = vld [vmem:[%s171 + $0xd0] sm:$0xff]
        %v289 = vld [vmem:[%s171 + $0xd8] sm:$0xff]
        %v290 = vld [vmem:[%s171 + $0xe0] sm:$0xff]
        %v291 = vld [vmem:[%s171 + $0xe8] sm:$0xff]
        %v292 = vld [vmem:[%s171 + $0xf0] sm:$0xff]
        %v293 = vld [vmem:[%s171 + $0xf8] sm:$0xff]
        %v294 = vld [vmem:[#allocation2] sm:$0xff]
        %v295 = vld [vmem:[#allocation2 + $0x8] sm:$0xff]
        %v296 = vld [vmem:[#allocation2 + $0x10] sm:$0xff]
        %v297 = vld [vmem:[#allocation2 + $0x18] sm:$0xff]
        %v298 = vld [vmem:[#allocation2 + $0x20] sm:$0xff]
        %v299 = vld [vmem:[#allocation2 + $0x28] sm:$0xff]
        %v300 = vld [vmem:[#allocation2 + $0x30] sm:$0xff]
        %v301 = vld [vmem:[#allocation2 + $0x38] sm:$0xff]
        %v302 = vld [vmem:[#allocation2 + $0x40] sm:$0xff]
        %v303 = vld [vmem:[#allocation2 + $0x48] sm:$0xff]
        %v304 = vld [vmem:[#allocation2 + $0x50] sm:$0xff]
        %v305 = vld [vmem:[#allocation2 + $0x58] sm:$0xff]
        %v306 = vld [vmem:[#allocation2 + $0x60] sm:$0xff]
        %v307 = vld [vmem:[#allocation2 + $0x68] sm:$0xff]
        %v308 = vld [vmem:[#allocation2 + $0x70] sm:$0xff]
        %v309 = vld [vmem:[#allocation2 + $0x78] sm:$0xff]
        %v310 = vadd.f32 %v262, %v263
        %311 = vadd.xlane.f32.xlu0 %v310
        %v312 = vpop.xlane.xlu0 %311
        %v313 = vadd.f32 %v264, %v265
        %314 = vadd.xlane.f32.xlu0 %v313
        %v315 = vpop.xlane.xlu0 %314
        %v316 = vadd.f32 %v266, %v267
        %317 = vadd.xlane.f32.xlu0 %v316
        %v318 = vpop.xlane.xlu0 %317
        %v319 = vadd.f32 %v268, %v269
        %320 = vadd.xlane.f32.xlu0 %v319
        %v321 = vpop.xlane.xlu0 %320
        %v322 = vadd.f32 %v270, %v271
        %323 = vadd.xlane.f32.xlu0 %v322
        %v324 = vpop.xlane.xlu0 %323
        %v325 = vadd.f32 %v272, %v273
        %326 = vadd.xlane.f32.xlu0 %v325
        %v327 = vpop.xlane.xlu0 %326
        %v328 = vadd.f32 %v274, %v275
        %329 = vadd.xlane.f32.xlu0 %v328
        %v330 = vpop.xlane.xlu0 %329
        %v331 = vadd.f32 %v276, %v277
        %332 = vadd.xlane.f32.xlu0 %v331
        %v333 = vpop.xlane.xlu0 %332
        %v334 = vadd.f32 %v278, %v279
        %335 = vadd.xlane.f32.xlu0 %v334
        %v336 = vpop.xlane.xlu0 %335
        %v337 = vadd.f32 %v280, %v281
        %338 = vadd.xlane.f32.xlu0 %v337
        %v339 = vpop.xlane.xlu0 %338
        %v340 = vadd.f32 %v282, %v283
        %341 = vadd.xlane.f32.xlu0 %v340
        %v342 = vpop.xlane.xlu0 %341
        %v343 = vadd.f32 %v284, %v285
        %344 = vadd.xlane.f32.xlu0 %v343
        %v345 = vpop.xlane.xlu0 %344
        %v346 = vadd.f32 %v286, %v287
        %347 = vadd.xlane.f32.xlu0 %v346
        %v348 = vpop.xlane.xlu0 %347
        %v349 = vadd.f32 %v288, %v289
        %350 = vadd.xlane.f32.xlu0 %v349
        %v351 = vpop.xlane.xlu0 %350
        %v352 = vadd.f32 %v290, %v291
        %353 = vadd.xlane.f32.xlu0 %v352
        %v354 = vpop.xlane.xlu0 %353
        %v355 = vadd.f32 %v292, %v293
        %356 = vadd.xlane.f32.xlu0 %v355
        %v357 = vpop.xlane.xlu0 %356
        %v358 = vadd.f32 %v294, %v312
        %v359 = vadd.f32 %v295, %v315
        %v360 = vadd.f32 %v296, %v318
        %v361 = vadd.f32 %v297, %v321
        %v362 = vadd.f32 %v298, %v324
        %v363 = vadd.f32 %v299, %v327
        %v364 = vadd.f32 %v300, %v330
        %v365 = vadd.f32 %v301, %v333
        %v366 = vadd.f32 %v302, %v336
        %v367 = vadd.f32 %v303, %v339
        %v368 = vadd.f32 %v304, %v342
        %v369 = vadd.f32 %v305, %v345
        %v370 = vadd.f32 %v306, %v348
        %v371 = vadd.f32 %v307, %v351
        %v372 = vadd.f32 %v308, %v354
        %v373 = vadd.f32 %v309, %v357
        %vm374 = vcmask 7168
        %375 = vst.msk [vmem:[#allocation2] sm:$0xff] %vm374, %v358
        %376 = vst.msk [vmem:[#allocation2 + $0x8] sm:$0xff] %vm374, %v359
        %377 = vst.msk [vmem:[#allocation2 + $0x10] sm:$0xff] %vm374, %v360
        %378 = vst.msk [vmem:[#allocation2 + $0x18] sm:$0xff] %vm374, %v361
        %379 = vst.msk [vmem:[#allocation2 + $0x20] sm:$0xff] %vm374, %v362
        %380 = vst.msk [vmem:[#allocation2 + $0x28] sm:$0xff] %vm374, %v363
        %381 = vst.msk [vmem:[#allocation2 + $0x30] sm:$0xff] %vm374, %v364
        %382 = vst.msk [vmem:[#allocation2 + $0x38] sm:$0xff] %vm374, %v365
        %383 = vst.msk [vmem:[#allocation2 + $0x40] sm:$0xff] %vm374, %v366
        %384 = vst.msk [vmem:[#allocation2 + $0x48] sm:$0xff] %vm374, %v367
        %385 = vst.msk [vmem:[#allocation2 + $0x50] sm:$0xff] %vm374, %v368
        %386 = vst.msk [vmem:[#allocation2 + $0x58] sm:$0xff] %vm374, %v369
        %387 = vst.msk [vmem:[#allocation2 + $0x60] sm:$0xff] %vm374, %v370
        %388 = vst.msk [vmem:[#allocation2 + $0x68] sm:$0xff] %vm374, %v371
        %389 = vst.msk [vmem:[#allocation2 + $0x70] sm:$0xff] %vm374, %v372
        %390 = vst.msk [vmem:[#allocation2 + $0x78] sm:$0xff] %vm374, %v373
        %v391 = vld [vmem:[#allocation3] sm:$0xff]
        %v392 = vld [vmem:[#allocation3 + $0x8] sm:$0xff]
        %v393 = vld [vmem:[#allocation3 + $0x10] sm:$0xff]
        %v394 = vld [vmem:[#allocation3 + $0x18] sm:$0xff]
        %v395 = vld [vmem:[#allocation3 + $0x20] sm:$0xff]
        %v396 = vld [vmem:[#allocation3 + $0x28] sm:$0xff]
        %v397 = vld [vmem:[#allocation3 + $0x30] sm:$0xff]
        %v398 = vld [vmem:[#allocation3 + $0x38] sm:$0xff]
        %v399 = vld [vmem:[#allocation3 + $0x40] sm:$0xff]
        %v400 = vld [vmem:[#allocation3 + $0x48] sm:$0xff]
        %v401 = vld [vmem:[#allocation3 + $0x50] sm:$0xff]
        %v402 = vld [vmem:[#allocation3 + $0x58] sm:$0xff]
        %v403 = vld [vmem:[#allocation3 + $0x60] sm:$0xff]
        %v404 = vld [vmem:[#allocation3 + $0x68] sm:$0xff]
        %v405 = vld [vmem:[#allocation3 + $0x70] sm:$0xff]
        %v406 = vld [vmem:[#allocation3 + $0x78] sm:$0xff]
        %v407 = vmul.f32 %v262, %v262
        %v408 = vmul.f32 %v263, %v263
        %v409 = vmul.f32 %v264, %v264
        %v410 = vmul.f32 %v265, %v265
        %v411 = vmul.f32 %v266, %v266
        %v412 = vmul.f32 %v267, %v267
        %v413 = vmul.f32 %v268, %v268
        %v414 = vmul.f32 %v269, %v269
        %v415 = vmul.f32 %v270, %v270
        %v416 = vmul.f32 %v271, %v271
        %v417 = vmul.f32 %v272, %v272
        %v418 = vmul.f32 %v273, %v273
        %v419 = vmul.f32 %v274, %v274
        %v420 = vmul.f32 %v275, %v275
        %v421 = vmul.f32 %v276, %v276
        %v422 = vmul.f32 %v277, %v277
        %v423 = vmul.f32 %v278, %v278
        %v424 = vmul.f32 %v279, %v279
        %v425 = vmul.f32 %v280, %v280
        %v426 = vmul.f32 %v281, %v281
        %v427 = vmul.f32 %v282, %v282
        %v428 = vmul.f32 %v283, %v283
        %v429 = vmul.f32 %v284, %v284
        %v430 = vmul.f32 %v285, %v285
        %v431 = vmul.f32 %v286, %v286
        %v432 = vmul.f32 %v287, %v287
        %v433 = vmul.f32 %v288, %v288
        %v434 = vmul.f32 %v289, %v289
        %v435 = vmul.f32 %v290, %v290
        %v436 = vmul.f32 %v291, %v291
        %v437 = vmul.f32 %v292, %v292
        %v438 = vmul.f32 %v293, %v293
        %v439 = vadd.f32 %v407, %v408
        %440 = vadd.xlane.f32.xlu0 %v439
        %v441 = vpop.xlane.xlu0 %440
        %v442 = vadd.f32 %v409, %v410
        %443 = vadd.xlane.f32.xlu0 %v442
        %v444 = vpop.xlane.xlu0 %443
        %v445 = vadd.f32 %v411, %v412
        %446 = vadd.xlane.f32.xlu0 %v445
        %v447 = vpop.xlane.xlu0 %446
        %v448 = vadd.f32 %v413, %v414
        %449 = vadd.xlane.f32.xlu0 %v448
        %v450 = vpop.xlane.xlu0 %449
        %v451 = vadd.f32 %v415, %v416
        %452 = vadd.xlane.f32.xlu0 %v451
        %v453 = vpop.xlane.xlu0 %452
        %v454 = vadd.f32 %v417, %v418
        %455 = vadd.xlane.f32.xlu0 %v454
        %v456 = vpop.xlane.xlu0 %455
        %v457 = vadd.f32 %v419, %v420
        %458 = vadd.xlane.f32.xlu0 %v457
        %v459 = vpop.xlane.xlu0 %458
        %v460 = vadd.f32 %v421, %v422
        %461 = vadd.xlane.f32.xlu0 %v460
        %v462 = vpop.xlane.xlu0 %461
        %v463 = vadd.f32 %v423, %v424
        %464 = vadd.xlane.f32.xlu0 %v463
        %v465 = vpop.xlane.xlu0 %464
        %v466 = vadd.f32 %v425, %v426
        %467 = vadd.xlane.f32.xlu0 %v466
        %v468 = vpop.xlane.xlu0 %467
        %v469 = vadd.f32 %v427, %v428
        %470 = vadd.xlane.f32.xlu0 %v469
        %v471 = vpop.xlane.xlu0 %470
        %v472 = vadd.f32 %v429, %v430
        %473 = vadd.xlane.f32.xlu0 %v472
        %v474 = vpop.xlane.xlu0 %473
        %v475 = vadd.f32 %v431, %v432
        %476 = vadd.xlane.f32.xlu0 %v475
        %v477 = vpop.xlane.xlu0 %476
        %v478 = vadd.f32 %v433, %v434
        %479 = vadd.xlane.f32.xlu0 %v478
        %v480 = vpop.xlane.xlu0 %479
        %v481 = vadd.f32 %v435, %v436
        %482 = vadd.xlane.f32.xlu0 %v481
        %v483 = vpop.xlane.xlu0 %482
        %v484 = vadd.f32 %v437, %v438
        %485 = vadd.xlane.f32.xlu0 %v484
        %v486 = vpop.xlane.xlu0 %485
        %v487 = vadd.f32 %v391, %v441
        %v488 = vadd.f32 %v392, %v444
        %v489 = vadd.f32 %v393, %v447
        %v490 = vadd.f32 %v394, %v450
        %v491 = vadd.f32 %v395, %v453
        %v492 = vadd.f32 %v396, %v456
        %v493 = vadd.f32 %v397, %v459
        %v494 = vadd.f32 %v398, %v462
        %v495 = vadd.f32 %v399, %v465
        %v496 = vadd.f32 %v400, %v468
        %v497 = vadd.f32 %v401, %v471
        %v498 = vadd.f32 %v402, %v474
        %v499 = vadd.f32 %v403, %v477
        %v500 = vadd.f32 %v404, %v480
        %v501 = vadd.f32 %v405, %v483
        %v502 = vadd.f32 %v406, %v486
        %503 = vst.msk [vmem:[#allocation3] sm:$0xff] %vm374, %v487
        %504 = vst.msk [vmem:[#allocation3 + $0x8] sm:$0xff] %vm374, %v488
        %505 = vst.msk [vmem:[#allocation3 + $0x10] sm:$0xff] %vm374, %v489
        %506 = vst.msk [vmem:[#allocation3 + $0x18] sm:$0xff] %vm374, %v490
        %507 = vst.msk [vmem:[#allocation3 + $0x20] sm:$0xff] %vm374, %v491
        %508 = vst.msk [vmem:[#allocation3 + $0x28] sm:$0xff] %vm374, %v492
        %509 = vst.msk [vmem:[#allocation3 + $0x30] sm:$0xff] %vm374, %v493
        %510 = vst.msk [vmem:[#allocation3 + $0x38] sm:$0xff] %vm374, %v494
        %511 = vst.msk [vmem:[#allocation3 + $0x40] sm:$0xff] %vm374, %v495
        %512 = vst.msk [vmem:[#allocation3 + $0x48] sm:$0xff] %vm374, %v496
        %513 = vst.msk [vmem:[#allocation3 + $0x50] sm:$0xff] %vm374, %v497
        %514 = vst.msk [vmem:[#allocation3 + $0x58] sm:$0xff] %vm374, %v498
        %515 = vst.msk [vmem:[#allocation3 + $0x60] sm:$0xff] %vm374, %v499
        %516 = vst.msk [vmem:[#allocation3 + $0x68] sm:$0xff] %vm374, %v500
        %517 = vst.msk [vmem:[#allocation3 + $0x70] sm:$0xff] %vm374, %v501
        %518 = vst.msk [vmem:[#allocation3 + $0x78] sm:$0xff] %vm374, %v502
        // Predicated region
        $region33: #{tpu_custom_call.1} parent=23 // pred_check
          %p519 = pneg %p225
        $region34: #{tpu_custom_call.1} parent=23 // pred_check_branch
          %521 = sbr.rel (%p519) target = $region36
        $region35: #{tpu_custom_call.1} parent=23 // pred_region
          %v522 = vld [vmem:[#allocation2] sm:$0xff]
          %v523 = vld [vmem:[#allocation2 + $0x8] sm:$0xff]
          %v524 = vld [vmem:[#allocation2 + $0x10] sm:$0xff]
          %v525 = vld [vmem:[#allocation2 + $0x18] sm:$0xff]
          %v526 = vld [vmem:[#allocation2 + $0x20] sm:$0xff]
          %v527 = vld [vmem:[#allocation2 + $0x28] sm:$0xff]
          %v528 = vld [vmem:[#allocation2 + $0x30] sm:$0xff]
          %v529 = vld [vmem:[#allocation2 + $0x38] sm:$0xff]
          %v530 = vld [vmem:[#allocation2 + $0x40] sm:$0xff]
          %v531 = vld [vmem:[#allocation2 + $0x48] sm:$0xff]
          %v532 = vld [vmem:[#allocation2 + $0x50] sm:$0xff]
          %v533 = vld [vmem:[#allocation2 + $0x58] sm:$0xff]
          %v534 = vld [vmem:[#allocation2 + $0x60] sm:$0xff]
          %v535 = vld [vmem:[#allocation2 + $0x68] sm:$0xff]
          %v536 = vld [vmem:[#allocation2 + $0x70] sm:$0xff]
          %v537 = vld [vmem:[#allocation2 + $0x78] sm:$0xff]
          %538 = vst.msk [vmem:[%s215] sm:$0xff] %vm374, %v522
          %539 = vst.msk [vmem:[%s215 + $0x8] sm:$0xff] %vm374, %v523
          %540 = vst.msk [vmem:[%s215 + $0x10] sm:$0xff] %vm374, %v524
          %541 = vst.msk [vmem:[%s215 + $0x18] sm:$0xff] %vm374, %v525
          %542 = vst.msk [vmem:[%s215 + $0x20] sm:$0xff] %vm374, %v526
          %543 = vst.msk [vmem:[%s215 + $0x28] sm:$0xff] %vm374, %v527
          %544 = vst.msk [vmem:[%s215 + $0x30] sm:$0xff] %vm374, %v528
          %545 = vst.msk [vmem:[%s215 + $0x38] sm:$0xff] %vm374, %v529
          %546 = vst.msk [vmem:[%s215 + $0x40] sm:$0xff] %vm374, %v530
          %547 = vst.msk [vmem:[%s215 + $0x48] sm:$0xff] %vm374, %v531
          %548 = vst.msk [vmem:[%s215 + $0x50] sm:$0xff] %vm374, %v532
          %549 = vst.msk [vmem:[%s215 + $0x58] sm:$0xff] %vm374, %v533
          %550 = vst.msk [vmem:[%s215 + $0x60] sm:$0xff] %vm374, %v534
          %551 = vst.msk [vmem:[%s215 + $0x68] sm:$0xff] %vm374, %v535
          %552 = vst.msk [vmem:[%s215 + $0x70] sm:$0xff] %vm374, %v536
          %553 = vst.msk [vmem:[%s215 + $0x78] sm:$0xff] %vm374, %v537
          %v554 = vld [vmem:[#allocation3] sm:$0xff]
          %v555 = vld [vmem:[#allocation3 + $0x8] sm:$0xff]
          %v556 = vld [vmem:[#allocation3 + $0x10] sm:$0xff]
          %v557 = vld [vmem:[#allocation3 + $0x18] sm:$0xff]
          %v558 = vld [vmem:[#allocation3 + $0x20] sm:$0xff]
          %v559 = vld [vmem:[#allocation3 + $0x28] sm:$0xff]
          %v560 = vld [vmem:[#allocation3 + $0x30] sm:$0xff]
          %v561 = vld [vmem:[#allocation3 + $0x38] sm:$0xff]
          %v562 = vld [vmem:[#allocation3 + $0x40] sm:$0xff]
          %v563 = vld [vmem:[#allocation3 + $0x48] sm:$0xff]
          %v564 = vld [vmem:[#allocation3 + $0x50] sm:$0xff]
          %v565 = vld [vmem:[#allocation3 + $0x58] sm:$0xff]
          %v566 = vld [vmem:[#allocation3 + $0x60] sm:$0xff]
          %v567 = vld [vmem:[#allocation3 + $0x68] sm:$0xff]
          %v568 = vld [vmem:[#allocation3 + $0x70] sm:$0xff]
          %v569 = vld [vmem:[#allocation3 + $0x78] sm:$0xff]
          %570 = vst.msk [vmem:[%s224] sm:$0xff] %vm374, %v554
          %571 = vst.msk [vmem:[%s224 + $0x8] sm:$0xff] %vm374, %v555
          %572 = vst.msk [vmem:[%s224 + $0x10] sm:$0xff] %vm374, %v556
          %573 = vst.msk [vmem:[%s224 + $0x18] sm:$0xff] %vm374, %v557
          %574 = vst.msk [vmem:[%s224 + $0x20] sm:$0xff] %vm374, %v558
          %575 = vst.msk [vmem:[%s224 + $0x28] sm:$0xff] %vm374, %v559
          %576 = vst.msk [vmem:[%s224 + $0x30] sm:$0xff] %vm374, %v560
          %577 = vst.msk [vmem:[%s224 + $0x38] sm:$0xff] %vm374, %v561
          %578 = vst.msk [vmem:[%s224 + $0x40] sm:$0xff] %vm374, %v562
          %579 = vst.msk [vmem:[%s224 + $0x48] sm:$0xff] %vm374, %v563
          %580 = vst.msk [vmem:[%s224 + $0x50] sm:$0xff] %vm374, %v564
          %581 = vst.msk [vmem:[%s224 + $0x58] sm:$0xff] %vm374, %v565
          %582 = vst.msk [vmem:[%s224 + $0x60] sm:$0xff] %vm374, %v566
          %583 = vst.msk [vmem:[%s224 + $0x68] sm:$0xff] %vm374, %v567
          %584 = vst.msk [vmem:[%s224 + $0x70] sm:$0xff] %vm374, %v568
          %585 = vst.msk [vmem:[%s224 + $0x78] sm:$0xff] %vm374, %v569
        $region36: #{tpu_custom_call.1} parent=23 // pred_fallthru
          _
        %p586 = scmp.lt.s32.totalorder %s22, 1
        %s587 = scalar_select %p586, %s22, 1
        %p588 = scmp.lt.s32.totalorder %s23, 0
        %s589 = scalar_select %p588, %s23, 0
        %s590 = smul.addr %s589, 16
        %s591 = smul.addr %s587, 16
        %s592 = sadd.s32 %s590, %s591
        %s593 = smul.addr %s592, 8
        %s594 = scalar_lea.vmem %s1, %s593
        %p595 = scmp.lt.s32.totalorder %s22, 1
        %s596 = scalar_select %p595, %s22, 1
        %p597 = scmp.lt.s32.totalorder %s23, 0
        %s598 = scalar_select %p597, %s23, 0
        %s599 = smul.addr %s598, 16
        %s600 = smul.addr %s596, 16
        %s601 = sadd.s32 %s599, %s600
        %s602 = smul.addr %s601, 8
        %s603 = scalar_lea.vmem %s2, %s602
        // Predicated region
        $region37: #{tpu_custom_call.1} parent=23 // pred_check
          %p604 = pneg %p86
        $region38: #{tpu_custom_call.1} parent=23 // pred_check_branch
          %606 = sbr.rel (%p604) target = $region40
        $region39: #{tpu_custom_call.1} parent=23 // pred_region
          _
        $region40: #{tpu_custom_call.1} parent=23 // pred_fallthru
          _
        // Predicated region
        $region41: #{tpu_custom_call.1} parent=23 // pred_check
          %p607 = pneg %p114
        $region42: #{tpu_custom_call.1} parent=23 // pred_check_branch
          %609 = sbr.rel (%p607) target = $region44
        $region43: #{tpu_custom_call.1} parent=23 // pred_region
          _
        $region44: #{tpu_custom_call.1} parent=23 // pred_fallthru
          _
      $region24: #{tpu_custom_call.1} parent=5 // pred_fallthru
        _
      %p610 = scmp.le.s32.totalorder 2, %s12
      // Predicated region
      $region45: #{tpu_custom_call.1} parent=5 // pred_check
        %p611 = pneg %p610
      $region46: #{tpu_custom_call.1} parent=5 // pred_check_branch
        %613 = sbr.rel (%p611) target = $region48
      $region47: #{tpu_custom_call.1} parent=5 // pred_region
        %s614 = ssub.s32 %s12, 2
        // Predicated region
        $region49: #{tpu_custom_call.1} parent=47 // pred_check
          %p615 = pneg %p92
        $region50: #{tpu_custom_call.1} parent=47 // pred_check_branch
          %617 = sbr.rel (%p615) target = $region52
        $region51: #{tpu_custom_call.1} parent=47 // pred_region
          %p618 = scmp.lt.s32.totalorder %s25, 1
          %s619 = scalar_select %p618, %s25, 1
          %p620 = scmp.lt.s32.totalorder %s26, 0
          %s621 = scalar_select %p620, %s26, 0
          %s622 = smul.addr %s621, 16
          %s623 = smul.addr %s619, 16
          %s624 = sadd.s32 %s622, %s623
          %s625 = smul.addr %s624, 8
          %s626 = scalar_lea.vmem %s1, %s625
        $region52: #{tpu_custom_call.1} parent=47 // pred_fallthru
          _
        // Predicated region
        $region53: #{tpu_custom_call.1} parent=47 // pred_check
          %p627 = pneg %p120
        $region54: #{tpu_custom_call.1} parent=47 // pred_check_branch
          %629 = sbr.rel (%p627) target = $region56
        $region55: #{tpu_custom_call.1} parent=47 // pred_region
          %p630 = scmp.lt.s32.totalorder %s25, 1
          %s631 = scalar_select %p630, %s25, 1
          %p632 = scmp.lt.s32.totalorder %s26, 0
          %s633 = scalar_select %p632, %s26, 0
          %s634 = smul.addr %s633, 16
          %s635 = smul.addr %s631, 16
          %s636 = sadd.s32 %s634, %s635
          %s637 = smul.addr %s636, 8
          %s638 = scalar_lea.vmem %s2, %s637
        $region56: #{tpu_custom_call.1} parent=47 // pred_fallthru
          _
      $region48: #{tpu_custom_call.1} parent=5 // pred_fallthru
        _
    $region6: #{tpu_custom_call.1} parent=1 // loop_footer
      %s16 = sadd.s32 1, %s12
    $region7: #{tpu_custom_call.1} parent=1 // loop_footer_branch
      %11 = sbr.rel target = $region3
    $region8: #{tpu_custom_call.1} parent=1 // loop_exit
      _
    %639 = vsyncpa [#allocation5], 1
    %s640 = scalar_lea.sflag [#allocation5], 1
    %641 = vsyncpa %s640, 1

</llo_original>
